<compile_context>
chip_gen: v7x
topology: tpu7x:2x2x1
jax: 0.10.0
libtpu: 0.0.40
codegen_flags: <defaults>
</compile_context>

<pallas_src>
import functools

import jax
import jax.numpy as jnp
from jax.experimental import pallas as pl
from jax.experimental.pallas import tpu as pltpu


def mmlp_kernel(x_ref, w1_ref, b1_ref, w2_ref, b2_ref, w3_ref, b3bb_ref, o_ref,
                *, sample_size):
    # x_ref: (TB * S, F) -- all S samples of the TB batch elements of this step.
    h1 = jnp.dot(x_ref[...], w1_ref[...], preferred_element_type=jnp.float32)
    h1 = jnp.maximum(h1 + b1_ref[...], 0.0)

    h2 = jnp.dot(h1.astype(w2_ref.dtype), w2_ref[...],
                 preferred_element_type=jnp.float32)
    h2 = jnp.maximum(h2 + b2_ref[...], 0.0)

    # Fused mean-pool BEFORE W3 (mean commutes with the affine map).  This is a
    # sublane-group reduction (XLU) -- no pooling matrix, no extra MXU work.
    tb = o_ref.shape[0]
    hidden = h2.shape[-1]
    pooled = jnp.mean(h2.reshape(tb, sample_size, hidden), axis=1)

    e = jnp.dot(pooled.astype(w3_ref.dtype), w3_ref[...],
                preferred_element_type=jnp.float32)
    # relu(mean_s(MLP(x)) + b);  Linear3 bias and MMLP.b are pre-folded (b3bb).
    o_ref[...] = jnp.maximum(e + b3bb_ref[...], 0.0)


def _choose_block_batch(batch_size, sample_size, target_rows, min_grid_steps=1):
    """How many batch elements (TB) to process per grid step."""
    tb = max(1, target_rows // max(1, sample_size))
    if min_grid_steps > 1 and batch_size >= 8 * min_grid_steps:
        # v7x: keep >= min_grid_steps parallel steps so both TCs get work.
        tb = min(tb, batch_size // min_grid_steps)
    if tb >= batch_size:
        return batch_size                 # single step; blocks == full arrays
    tb = max(8, (tb // 8) * 8)            # keep output block sublane-dense
    for cand in range(tb, 7, -8):         # prefer a divisor -> no padded x copy
        if batch_size % cand == 0:
            return cand
    return tb


def _vmem_limit_bytes(rows, tb, features_dim, hidden_dim, out_dim, matmul_itemsize):
    """Scoped-VMEM limit from the real (lane-padded, double-buffered) footprint."""
    lane = 128
    pad = lambda c: ((c + lane - 1) // lane) * lane
    x_blk = rows * pad(features_dim) * matmul_itemsize
    h_blk = rows * pad(hidden_dim) * 4                    # f32 intermediates
    out_blk = tb * pad(out_dim) * 4
    weights = (max(8, features_dim) * pad(hidden_dim)
               + hidden_dim * pad(hidden_dim)
               + hidden_dim * pad(out_dim)) * matmul_itemsize
    biases = 3 * 8 * lane * 4
    est = 2 * (x_blk + out_blk + weights + biases) + 2 * h_blk
    # Generous headroom, clamped under v7x's 64 MiB physical VMEM.
    return int(min(64 * 1024 * 1024, max(2 * est, 16 * 1024 * 1024)))


def mmlp_forward(x, params, *, batch_size, sample_size, out_dim,
                 matmul_dtype=jnp.float32, target_rows=8192, min_grid_steps=1):
    """x: (batch*sample, features) f32 -> (batch, out_dim) f32."""
    w1, b1, w2, b2, w3, b3, bb = params
    features_dim = x.shape[-1]
    hidden_dim = w1.shape[-1]

    tb = _choose_block_batch(batch_size, sample_size, target_rows, min_grid_steps)
    padded_batch = pl.cdiv(batch_size, tb) * tb
    rows = tb * sample_size                # x rows handled per grid step

    # Cast matmul operands in the wrapper so DMA'd bytes shrink too;
    # accumulation and elementwise math stay f32.
    x = x.astype(matmul_dtype)
    if padded_batch != batch_size:
        # Fallback only when no multiple-of-8 divisor of batch_size exists.
        pad_rows = (padded_batch - batch_size) * sample_size
        x = jnp.pad(x, ((0, pad_rows), (0, 0)))
    w1c = w1.astype(matmul_dtype)
    w2c = w2.astype(matmul_dtype)
    w3c = w3.astype(matmul_dtype)
    b3bb = (b3 + bb).astype(jnp.float32)   # fold Linear3 bias and MMLP.b

    grid = (padded_batch // tb,)
    const = lambda shape: pl.BlockSpec(shape, lambda i: (0, 0))

    itemsize = jnp.dtype(matmul_dtype).itemsize
    total_rows = padded_batch * sample_size
    flops = (2 * total_rows * features_dim * hidden_dim
             + 2 * total_rows * hidden_dim * hidden_dim
             + 2 * padded_batch * hidden_dim * out_dim)
    bytes_accessed = (total_rows * features_dim * itemsize
                      + (features_dim + hidden_dim) * hidden_dim * itemsize
                      + hidden_dim * out_dim * itemsize
                      + (2 * hidden_dim + out_dim) * 4
                      + padded_batch * out_dim * 4)

    out = pl.pallas_call(
        functools.partial(mmlp_kernel, sample_size=sample_size),
        out_shape=jax.ShapeDtypeStruct((padded_batch, out_dim), jnp.float32),
        grid_spec=pltpu.PrefetchScalarGridSpec(
            num_scalar_prefetch=0,
            grid=grid,
            in_specs=[
                # rows [i*TB*S, (i+1)*TB*S) of x: TB batch elements per step.
                pl.BlockSpec((rows, features_dim), lambda i: (i, 0)),
                const((features_dim, hidden_dim)),    # W1
                const((1, hidden_dim)),               # b1
                const((hidden_dim, hidden_dim)),      # W2
                const((1, hidden_dim)),               # b2
                const((hidden_dim, out_dim)),         # W3
                const((1, out_dim)),                  # b3 + MMLP.b (pre-folded)
            ],
            out_specs=pl.BlockSpec((tb, out_dim), lambda i: (i, 0)),
        ),
        compiler_params=pltpu.CompilerParams(
            dimension_semantics=("parallel",),
            vmem_limit_bytes=_vmem_limit_bytes(
                rows, tb, features_dim, hidden_dim, out_dim, itemsize)),
        cost_estimate=pl.CostEstimate(flops=int(flops), transcendentals=0,
                                      bytes_accessed=int(bytes_accessed)),
    )(x, w1c, b1, w2c, b2, w3c, b3bb)

    return out[:batch_size]


def xavier_uniform(key, fan_in, fan_out):
    # torch.nn.init.xavier_uniform_ with gain=1; stored (in, out) so kernel does x @ W.
    bound = (6.0 / (fan_in + fan_out)) ** 0.5
    return jax.random.uniform(key, (fan_in, fan_out), jnp.float32, -bound, bound)


def init_params(key, features_dim, hidden_dim, out_dim):
    k1, k2, k3 = jax.random.split(key, 3)
    w1 = xavier_uniform(k1, features_dim, hidden_dim)
    b1 = jnp.zeros((1, hidden_dim), jnp.float32)
    w2 = xavier_uniform(k2, hidden_dim, hidden_dim)
    b2 = jnp.zeros((1, hidden_dim), jnp.float32)
    w3 = xavier_uniform(k3, hidden_dim, out_dim)
    b3 = jnp.zeros((1, out_dim), jnp.float32)
    bb = jnp.zeros((1, out_dim), jnp.float32)  # self.b in MMLP (zeros)
    return (w1, b1, w2, b2, w3, b3, bb)


def mmlp_reference(x, params, *, batch_size, sample_size, out_dim):
    # Pure-JAX reference in the original PyTorch order (pool AFTER the last
    # linear), so it also validates the kernel's pool/W3 fusion.
    w1, b1, w2, b2, w3, b3, bb = params
    h = jnp.maximum(x @ w1 + b1, 0.0)
    h = jnp.maximum(h @ w2 + b2, 0.0)
    e = h @ w3 + b3
    e = e.reshape(batch_size, sample_size, out_dim).mean(axis=1)
    return jnp.maximum(e + bb, 0.0)


if __name__ == "__main__":
    sample_size = 8
    features_dim = 4
    hidden_dim = 32
    out_dim = 16

    key = jax.random.PRNGKey(0)
    kx, kp, kx2 = jax.random.split(key, 3)
    params = init_params(kp, features_dim, hidden_dim, out_dim)

    # --- check 1: small config (batch=2, single grid step, f32) ---
    batch_size = 2
    x = jax.random.normal(kx, (batch_size * sample_size, features_dim),
                          dtype=jnp.float32)
    out = jax.block_until_ready(
        mmlp_forward(x, params, batch_size=batch_size,
                     sample_size=sample_size, out_dim=out_dim))
    ref = mmlp_reference(x, params, batch_size=batch_size,
                         sample_size=sample_size, out_dim=out_dim)
    assert out.shape == (batch_size, out_dim)
    assert jnp.allclose(out, ref, atol=1e-4, rtol=1e-4)

    # --- check 2: larger batch, default tiling (single big step, f32) ---
    big_batch = 128
    x2 = jax.random.normal(kx2, (big_batch * sample_size, features_dim),
                           dtype=jnp.float32)
    ref2 = mmlp_reference(x2, params, batch_size=big_batch,
                          sample_size=sample_size, out_dim=out_dim)
    out2 = jax.block_until_ready(
        mmlp_forward(x2, params, batch_size=big_batch,
                     sample_size=sample_size, out_dim=out_dim))
    assert out2.shape == (big_batch, out_dim)
    assert jnp.allclose(out2, ref2, atol=1e-4, rtol=1e-4)

    # --- check 3: multi-step grid (4 parallel steps, no padding, f32) ---
    out3 = jax.block_until_ready(
        mmlp_forward(x2, params, batch_size=big_batch,
                     sample_size=sample_size, out_dim=out_dim,
                     target_rows=256))
    assert jnp.allclose(out3, ref2, atol=1e-4, rtol=1e-4)

    # --- check 4: bf16 matmul operands, >=2 parallel steps (v7x-style) ---
    out4 = jax.block_until_ready(
        mmlp_forward(x2, params, batch_size=big_batch,
                     sample_size=sample_size, out_dim=out_dim,
                     matmul_dtype=jnp.bfloat16, min_grid_steps=2))
    assert out4.shape == (big_batch, out_dim)
    assert jnp.allclose(out4, ref2, atol=5e-2, rtol=5e-2)

    print("KERNEL_OK")
</pallas_src>

<mosaic_0001>
module attributes {stable_mosaic.version = 11 : i64} {
  func.func @mmlp_kernel(%arg0: i32, %arg1: memref<16x4xf32, #tpu.memory_space<vmem>>, %arg2: memref<4x32xf32, #tpu.memory_space<vmem>>, %arg3: memref<1x32xf32, #tpu.memory_space<vmem>>, %arg4: memref<32x32xf32, #tpu.memory_space<vmem>>, %arg5: memref<1x32xf32, #tpu.memory_space<vmem>>, %arg6: memref<32x16xf32, #tpu.memory_space<vmem>>, %arg7: memref<1x16xf32, #tpu.memory_space<vmem>>, %arg8: memref<2x16xf32, #tpu.memory_space<vmem>>) attributes {dimension_semantics = [#tpu.dimension_semantics<parallel>], iteration_bounds = array<i64: 1>, scalar_prefetch = 0 : i64, scratch_operands = 0 : i64, tpu.core_type = #tpu.core_type<tc>, window_params = [{transform_indices = @transform_0, window_bounds = array<i64: 16, 4>}, {pipeline_mode = #tpu.pipeline_mode<synchronous>, transform_indices = @transform_1, window_bounds = array<i64: 4, 32>}, {pipeline_mode = #tpu.pipeline_mode<synchronous>, transform_indices = @transform_2, window_bounds = array<i64: 1, 32>}, {pipeline_mode = #tpu.pipeline_mode<synchronous>, transform_indices = @transform_3, window_bounds = array<i64: 32, 32>}, {pipeline_mode = #tpu.pipeline_mode<synchronous>, transform_indices = @transform_4, window_bounds = array<i64: 1, 32>}, {pipeline_mode = #tpu.pipeline_mode<synchronous>, transform_indices = @transform_5, window_bounds = array<i64: 32, 16>}, {pipeline_mode = #tpu.pipeline_mode<synchronous>, transform_indices = @transform_6, window_bounds = array<i64: 1, 16>}, {transform_indices = @transform_7, window_bounds = array<i64: 2, 16>}]} {
    %c0 = arith.constant 0 : index
    %c0_0 = arith.constant 0 : index
    %0 = vector.load %arg1[%c0, %c0_0] : memref<16x4xf32, #tpu.memory_space<vmem>>, vector<16x4xf32>
    %c0_1 = arith.constant 0 : index
    %c0_2 = arith.constant 0 : index
    %1 = vector.load %arg2[%c0_1, %c0_2] : memref<4x32xf32, #tpu.memory_space<vmem>>, vector<4x32xf32>
    %cst = arith.constant dense<0.000000e+00> : vector<16x32xf32>
    %2 = tpu.matmul %0, %1, %cst {dimension_numbers = #tpu.dot_dimension_numbers<[1], [0], [0], [1], [0, 0, 1, 1], [], []>} : vector<16x4xf32>, vector<4x32xf32>, vector<16x32xf32> -> vector<16x32xf32>
    %c0_3 = arith.constant 0 : index
    %c0_4 = arith.constant 0 : index
    %3 = vector.load %arg3[%c0_3, %c0_4] : memref<1x32xf32, #tpu.memory_space<vmem>>, vector<1x32xf32>
    %4 = vector.broadcast %3 : vector<1x32xf32> to vector<16x32xf32>
    %5 = arith.addf %2, %4 : vector<16x32xf32>
    %cst_5 = arith.constant 0.000000e+00 : f32
    %6 = vector.broadcast %cst_5 : f32 to vector<16x32xf32>
    %7 = arith.maximumf %5, %6 : vector<16x32xf32>
    %c0_6 = arith.constant 0 : index
    %c0_7 = arith.constant 0 : index
    %8 = vector.load %arg4[%c0_6, %c0_7] : memref<32x32xf32, #tpu.memory_space<vmem>>, vector<32x32xf32>
    %cst_8 = arith.constant dense<0.000000e+00> : vector<16x32xf32>
    %9 = tpu.matmul %7, %8, %cst_8 {dimension_numbers = #tpu.dot_dimension_numbers<[1], [0], [0], [1], [0, 0, 1, 1], [], []>} : vector<16x32xf32>, vector<32x32xf32>, vector<16x32xf32> -> vector<16x32xf32>
    %c0_9 = arith.constant 0 : index
    %c0_10 = arith.constant 0 : index
    %10 = vector.load %arg5[%c0_9, %c0_10] : memref<1x32xf32, #tpu.memory_space<vmem>>, vector<1x32xf32>
    %11 = vector.broadcast %10 : vector<1x32xf32> to vector<16x32xf32>
    %12 = arith.addf %9, %11 : vector<16x32xf32>
    %cst_11 = arith.constant 0.000000e+00 : f32
    %13 = vector.broadcast %cst_11 : f32 to vector<16x32xf32>
    %14 = arith.maximumf %12, %13 : vector<16x32xf32>
    %15 = vector.shape_cast %14 : vector<16x32xf32> to vector<2x8x32xf32>
    %cst_12 = arith.constant dense<0.000000e+00> : vector<2x32xf32>
    %16 = vector.multi_reduction <add>, %15, %cst_12 [1] : vector<2x8x32xf32> to vector<2x32xf32>
    %cst_13 = arith.constant 8.000000e+00 : f32
    %17 = vector.broadcast %cst_13 : f32 to vector<2x32xf32>
    %18 = arith.divf %16, %17 : vector<2x32xf32>
    %c0_14 = arith.constant 0 : index
    %c0_15 = arith.constant 0 : index
    %19 = vector.load %arg6[%c0_14, %c0_15] : memref<32x16xf32, #tpu.memory_space<vmem>>, vector<32x16xf32>
    %cst_16 = arith.constant dense<0.000000e+00> : vector<2x16xf32>
    %20 = tpu.matmul %18, %19, %cst_16 {dimension_numbers = #tpu.dot_dimension_numbers<[1], [0], [0], [1], [0, 0, 1, 1], [], []>} : vector<2x32xf32>, vector<32x16xf32>, vector<2x16xf32> -> vector<2x16xf32>
    %c0_17 = arith.constant 0 : index
    %c0_18 = arith.constant 0 : index
    %21 = vector.load %arg7[%c0_17, %c0_18] : memref<1x16xf32, #tpu.memory_space<vmem>>, vector<1x16xf32>
    %22 = vector.broadcast %21 : vector<1x16xf32> to vector<2x16xf32>
    %23 = arith.addf %20, %22 : vector<2x16xf32>
    %cst_19 = arith.constant 0.000000e+00 : f32
    %24 = vector.broadcast %cst_19 : f32 to vector<2x16xf32>
    %25 = arith.maximumf %23, %24 : vector<2x16xf32>
    %c0_20 = arith.constant 0 : index
    %c0_21 = arith.constant 0 : index
    %26 = vector.load %arg8[%c0_20, %c0_21] : memref<2x16xf32, #tpu.memory_space<vmem>>, vector<2x16xf32>
    tpu.vector_store %arg8[%c0_20, %c0_21], %25 {strides = array<i32>} : memref<2x16xf32, #tpu.memory_space<vmem>>, vector<2x16xf32>,
    return
  }
  func.func @transform_0(%arg0: i32) -> (i32, i32) {
    %c0_i32 = arith.constant 0 : i32
    %c0_i32_0 = arith.constant 0 : i32
    return %arg0, %c0_i32 : i32, i32
  }
  func.func @transform_1(%arg0: i32) -> (i32, i32) {
    %c0_i32 = arith.constant 0 : i32
    %c0_i32_0 = arith.constant 0 : i32
    %c0_i32_1 = arith.constant 0 : i32
    return %c0_i32, %c0_i32_0 : i32, i32
  }
  func.func @transform_2(%arg0: i32) -> (i32, i32) {
    %c0_i32 = arith.constant 0 : i32
    %c0_i32_0 = arith.constant 0 : i32
    %c0_i32_1 = arith.constant 0 : i32
    return %c0_i32, %c0_i32_0 : i32, i32
  }
  func.func @transform_3(%arg0: i32) -> (i32, i32) {
    %c0_i32 = arith.constant 0 : i32
    %c0_i32_0 = arith.constant 0 : i32
    %c0_i32_1 = arith.constant 0 : i32
    return %c0_i32, %c0_i32_0 : i32, i32
  }
  func.func @transform_4(%arg0: i32) -> (i32, i32) {
    %c0_i32 = arith.constant 0 : i32
    %c0_i32_0 = arith.constant 0 : i32
    %c0_i32_1 = arith.constant 0 : i32
    return %c0_i32, %c0_i32_0 : i32, i32
  }
  func.func @transform_5(%arg0: i32) -> (i32, i32) {
    %c0_i32 = arith.constant 0 : i32
    %c0_i32_0 = arith.constant 0 : i32
    %c0_i32_1 = arith.constant 0 : i32
    return %c0_i32, %c0_i32_0 : i32, i32
  }
  func.func @transform_6(%arg0: i32) -> (i32, i32) {
    %c0_i32 = arith.constant 0 : i32
    %c0_i32_0 = arith.constant 0 : i32
    %c0_i32_1 = arith.constant 0 : i32
    return %c0_i32, %c0_i32_0 : i32, i32
  }
  func.func @transform_7(%arg0: i32) -> (i32, i32) {
    %c0_i32 = arith.constant 0 : i32
    %c0_i32_0 = arith.constant 0 : i32
    return %arg0, %c0_i32 : i32, i32
  }
}

</mosaic_0001>

<llo_original>
// kernel: tpu_custom_call.1
$region0: #{tpu_custom_call.1}
  #allocation0 [shape = 'u32[]', space=smem, size = 0x4, offset = 0x4, fixed_abs, tag = 'smem constant byte address 0x4 - core index']
  #allocation1 [shape = 'u32[144,128]{1,0:T(1,128)}', space=vmem, size = 0x12000, scoped, tag = 'internal scratch']
  %s0 = inlined_call_operand.vmem [shape: f32[16,4], index: 0, kind: input, shape index: {}]
  %s1 = inlined_call_operand.vmem [shape: f32[4,32], index: 1, kind: input, shape index: {}]
  %s2 = inlined_call_operand.vmem [shape: f32[1,32], index: 2, kind: input, shape index: {}]
  %s3 = inlined_call_operand.vmem [shape: f32[32,32], index: 3, kind: input, shape index: {}]
  %s4 = inlined_call_operand.vmem [shape: f32[1,32], index: 4, kind: input, shape index: {}]
  %s5 = inlined_call_operand.vmem [shape: f32[32,16], index: 5, kind: input, shape index: {}]
  %s6 = inlined_call_operand.vmem [shape: f32[1,16], index: 6, kind: input, shape index: {}]
  %s7 = inlined_call_operand.hbm [shape: f32[2,16], index: 7, kind: output, shape index: {}]
  %s8 = sld [smem:[#allocation0]]
  $region38: #{tpu_custom_call.1} parent=0
    _
  %s10 = ssub.s32 1, %s8
  %s11 = scalar_select 0, %s10, %s8
  $region1: #{tpu_custom_call.1} parent=0
    #allocation2 [shape = 'u8[1024]{0}', space=vmem, size = 0x400, scoped, tag = 'output window, operand 0, single buffered']
    #allocation3 [shape = 's32[1]{0}', space=sflag, size = 0x4, scoped, tag = 'scoped memory for tpu_custom_call.1']
    %12 = vsyncpa [#allocation3], 0
    // Predicated region
    $region2: #{tpu_custom_call.1} parent=1 // pred_check
      _
    $region3: #{tpu_custom_call.1} parent=1 // pred_check_branch
      %14 = sbr.rel (0) target = $region5
    $region4: #{tpu_custom_call.1} parent=1 // pred_region
      _
    $region5: #{tpu_custom_call.1} parent=1 // pred_fallthru
      _
    // Predicated region
    $region6: #{tpu_custom_call.1} parent=1 // pred_check
      _
    $region7: #{tpu_custom_call.1} parent=1 // pred_check_branch
      %16 = sbr.rel (0) target = $region9
    $region8: #{tpu_custom_call.1} parent=1 // pred_region
      _
    $region9: #{tpu_custom_call.1} parent=1 // pred_fallthru
      _
    // Predicated region
    $region10: #{tpu_custom_call.1} parent=1 // pred_check
      _
    $region11: #{tpu_custom_call.1} parent=1 // pred_check_branch
      %18 = sbr.rel (0) target = $region13
    $region12: #{tpu_custom_call.1} parent=1 // pred_region
      _
    $region13: #{tpu_custom_call.1} parent=1 // pred_fallthru
      _
    // Predicated region
    $region14: #{tpu_custom_call.1} parent=1 // pred_check
      _
    $region15: #{tpu_custom_call.1} parent=1 // pred_check_branch
      %20 = sbr.rel (0) target = $region17
    $region16: #{tpu_custom_call.1} parent=1 // pred_region
      _
    $region17: #{tpu_custom_call.1} parent=1 // pred_fallthru
      _
    // Predicated region
    $region18: #{tpu_custom_call.1} parent=1 // pred_check
      _
    $region19: #{tpu_custom_call.1} parent=1 // pred_check_branch
      %22 = sbr.rel (0) target = $region21
    $region20: #{tpu_custom_call.1} parent=1 // pred_region
      _
    $region21: #{tpu_custom_call.1} parent=1 // pred_fallthru
      _
    // Predicated region
    $region22: #{tpu_custom_call.1} parent=1 // pred_check
      _
    $region23: #{tpu_custom_call.1} parent=1 // pred_check_branch
      %24 = sbr.rel (0) target = $region25
    $region24: #{tpu_custom_call.1} parent=1 // pred_region
      _
    $region25: #{tpu_custom_call.1} parent=1 // pred_fallthru
      _
    // Predicated region
    $region26: #{tpu_custom_call.1} parent=1 // pred_check
      _
    $region27: #{tpu_custom_call.1} parent=1 // pred_check_branch
      %26 = sbr.rel (0) target = $region29
    $region28: #{tpu_custom_call.1} parent=1 // pred_region
      _
    $region29: #{tpu_custom_call.1} parent=1 // pred_fallthru
      _
    %v27 = vld [vmem:[%s0] sm:$0xff]
    %v28 = vld [vmem:[%s0 + $0x8] sm:$0xff]
    %v29 = vld [vmem:[%s1] sm:$0xf]
    %v30 = vld [vmem:[%s2] sm:$0x1]
    %v32 = vlaneseq
    %v33 = vshrl.u32 %v32, 7
    %v34 = vsub.s32 0, %v33
    %v35 = vrot.slane %v30, %v34
    %vm37 = vcmask 31744
    %v39 = vsel %vm37, %v27, 0
    %v42 = vsel %vm37, %v28, 0
    %vm44 = vcmask 1043456
    %v46 = vsel %vm44, %v29, 0
    %48 = vmatprep.subr.mxu0 0.0
    %49 = vmatpush1.msra.mxu0 %v46
    %50 = vmatprep.subr.mxu0 0.0
    %51 = vmatpush1.msra.mxu0 0.0
    %52 = vmatprep.subr.mxu0 0.0
    %53 = vmatpush1.msra.mxu0 0.0
    %54 = vmatprep.subr.mxu0 0.0
    %55 = vmatpush1.msra.mxu0 0.0
    %56 = vmatprep.subr.mxu0 0.0
    %57 = vmatpush1.msra.mxu0 0.0
    %58 = vmatprep.subr.mxu0 0.0
    %59 = vmatpush1.msra.mxu0 0.0
    %60 = vmatprep.subr.mxu0 0.0
    %61 = vmatpush1.msra.mxu0 0.0
    %62 = vmatprep.subr.mxu0 0.0
    %63 = vmatpush1.msra.mxu0 0.0
    %64 = vmatprep.subr.mxu0 0.0
    %65 = vmatpush1.msra.mxu0 0.0
    %66 = vmatprep.subr.mxu0 0.0
    %67 = vmatpush1.msra.mxu0 0.0
    %68 = vmatprep.subr.mxu0 0.0
    %69 = vmatpush1.msra.mxu0 0.0
    %70 = vmatprep.subr.mxu0 0.0
    %71 = vmatpush1.msra.mxu0 0.0
    %72 = vmatprep.subr.mxu0 0.0
    %73 = vmatpush1.msra.mxu0 0.0
    %74 = vmatprep.subr.mxu0 0.0
    %75 = vmatpush1.msra.mxu0 0.0
    %76 = vmatprep.subr.mxu0 0.0
    %77 = vmatpush1.msra.mxu0 0.0
    %78 = vmatprep.subr.mxu0 0.0
    %79 = vmatpush1.msra.mxu0 0.0
    %80 = vmatprep.subr.mxu0 0.0
    %81 = vmatpush1.msra.mxu0 0.0
    %82 = vmatprep.subr.mxu0 0.0
    %83 = vmatpush1.msra.mxu0 0.0
    %84 = vmatprep.subr.mxu0 0.0
    %85 = vmatpush1.msra.mxu0 0.0
    %86 = vmatprep.subr.mxu0 0.0
    %87 = vmatpush1.msra.mxu0 0.0
    %88 = vmatprep.subr.mxu0 0.0
    %89 = vmatpush1.msra.mxu0 0.0
    %90 = vmatprep.subr.mxu0 0.0
    %91 = vmatpush1.msra.mxu0 0.0
    %92 = vmatprep.subr.mxu0 0.0
    %93 = vmatpush1.msra.mxu0 0.0
    %94 = vmatprep.subr.mxu0 0.0
    %95 = vmatpush1.msra.mxu0 0.0
    %96 = vmatprep.subr.mxu0 0.0
    %97 = vmatpush1.msra.mxu0 0.0
    %98 = vmatprep.subr.mxu0 0.0
    %99 = vmatpush1.msra.mxu0 0.0
    %100 = vmatprep.subr.mxu0 0.0
    %101 = vmatpush1.msra.mxu0 0.0
    %102 = vmatprep.subr.mxu0 0.0
    %103 = vmatpush1.msra.mxu0 0.0
    %104 = vmatprep.subr.mxu0 0.0
    %105 = vmatpush1.msra.mxu0 0.0
    %106 = vmatprep.subr.mxu0 0.0
    %107 = vmatpush1.msra.mxu0 0.0
    %108 = vmatprep.subr.mxu0 0.0
    %109 = vmatpush1.msra.mxu0 0.0
    %110 = vmatprep.subr.mxu0 0.0
    %111 = vmatpush1.msra.mxu0 0.0
    %112 = vmatprep.mubr.f32.mxu0 0.0
    %113 = vmatmul.mubr.f32.gmra.mrb[0].mxu0 %v39
    %v114 = vpop.f32.mrb[0].mxu0
    %v115 = vadd.f32 %v35, %v114
    %v116 = vpop.f32.mrb[0].mxu0
    %117 = vmatprep.mubr.f32.mxu0 0.0
    %118 = vmatmul.mubr.f32.gmra.mrb[0].mxu0 %v42
    %v119 = vpop.f32.mrb[0].mxu0
    %v120 = vadd.f32 %v35, %v119
    %v121 = vpop.f32.mrb[0].mxu0
    %122 = vdwg.mxu0
    %v123 = vmax.f32 %v115, 0.0
    %v124 = vmax.f32 %v120, 0.0
    %v125 = vld [vmem:[%s3] sm:$0xff]
    %v126 = vld [vmem:[%s3 + $0x8] sm:$0xff]
    %v127 = vld [vmem:[%s3 + $0x10] sm:$0xff]
    %v128 = vld [vmem:[%s3 + $0x18] sm:$0xff]
    %v129 = vld [vmem:[%s4] sm:$0x1]
    %v131 = vlaneseq
    %v132 = vshrl.u32 %v131, 7
    %v133 = vsub.s32 0, %v132
    %v134 = vrot.slane %v129, %v133
    %vm136 = vcmask 261120
    %v138 = vsel %vm136, %v123, 0
    %v141 = vsel %vm136, %v124, 0
    %143 = vmatprep.subr.mxu0 0.0
    %144 = vmatpush1.msra.mxu0 %v125
    %145 = vmatprep.subr.mxu0 0.0
    %146 = vmatpush1.msra.mxu0 %v126
    %147 = vmatprep.subr.mxu0 0.0
    %148 = vmatpush1.msra.mxu0 %v127
    %149 = vmatprep.subr.mxu0 0.0
    %150 = vmatpush1.msra.mxu0 %v128
    %151 = vmatprep.subr.mxu0 0.0
    %152 = vmatpush1.msra.mxu0 0.0
    %153 = vmatprep.subr.mxu0 0.0
    %154 = vmatpush1.msra.mxu0 0.0
    %155 = vmatprep.subr.mxu0 0.0
    %156 = vmatpush1.msra.mxu0 0.0
    %157 = vmatprep.subr.mxu0 0.0
    %158 = vmatpush1.msra.mxu0 0.0
    %159 = vmatprep.subr.mxu0 0.0
    %160 = vmatpush1.msra.mxu0 0.0
    %161 = vmatprep.subr.mxu0 0.0
    %162 = vmatpush1.msra.mxu0 0.0
    %163 = vmatprep.subr.mxu0 0.0
    %164 = vmatpush1.msra.mxu0 0.0
    %165 = vmatprep.subr.mxu0 0.0
    %166 = vmatpush1.msra.mxu0 0.0
    %167 = vmatprep.subr.mxu0 0.0
    %168 = vmatpush1.msra.mxu0 0.0
    %169 = vmatprep.subr.mxu0 0.0
    %170 = vmatpush1.msra.mxu0 0.0
    %171 = vmatprep.subr.mxu0 0.0
    %172 = vmatpush1.msra.mxu0 0.0
    %173 = vmatprep.subr.mxu0 0.0
    %174 = vmatpush1.msra.mxu0 0.0
    %175 = vmatprep.subr.mxu0 0.0
    %176 = vmatpush1.msra.mxu0 0.0
    %177 = vmatprep.subr.mxu0 0.0
    %178 = vmatpush1.msra.mxu0 0.0
    %179 = vmatprep.subr.mxu0 0.0
    %180 = vmatpush1.msra.mxu0 0.0
    %181 = vmatprep.subr.mxu0 0.0
    %182 = vmatpush1.msra.mxu0 0.0
    %183 = vmatprep.subr.mxu0 0.0
    %184 = vmatpush1.msra.mxu0 0.0
    %185 = vmatprep.subr.mxu0 0.0
    %186 = vmatpush1.msra.mxu0 0.0
    %187 = vmatprep.subr.mxu0 0.0
    %188 = vmatpush1.msra.mxu0 0.0
    %189 = vmatprep.subr.mxu0 0.0
    %190 = vmatpush1.msra.mxu0 0.0
    %191 = vmatprep.subr.mxu0 0.0
    %192 = vmatpush1.msra.mxu0 0.0
    %193 = vmatprep.subr.mxu0 0.0
    %194 = vmatpush1.msra.mxu0 0.0
    %195 = vmatprep.subr.mxu0 0.0
    %196 = vmatpush1.msra.mxu0 0.0
    %197 = vmatprep.subr.mxu0 0.0
    %198 = vmatpush1.msra.mxu0 0.0
    %199 = vmatprep.subr.mxu0 0.0
    %200 = vmatpush1.msra.mxu0 0.0
    %201 = vmatprep.subr.mxu0 0.0
    %202 = vmatpush1.msra.mxu0 0.0
    %203 = vmatprep.subr.mxu0 0.0
    %204 = vmatpush1.msra.mxu0 0.0
    %205 = vmatprep.subr.mxu0 0.0
    %206 = vmatpush1.msra.mxu0 0.0
    %207 = vmatprep.mubr.f32.mxu0 0.0
    %208 = vmatmul.mubr.f32.gmra.mrb[0].mxu0 %v138
    %v209 = vpop.f32.mrb[0].mxu0
    %v210 = vadd.f32 %v134, %v209
    %v211 = vpop.f32.mrb[0].mxu0
    %212 = vmatprep.mubr.f32.mxu0 0.0
    %213 = vmatmul.mubr.f32.gmra.mrb[0].mxu0 %v141
    %v214 = vpop.f32.mrb[0].mxu0
    %v215 = vadd.f32 %v134, %v214
    %v216 = vpop.f32.mrb[0].mxu0
    %217 = vdwg.mxu0
    %v218 = vmax.f32 %v210, 0.0
    %v219 = vmax.f32 %v215, 0.0
    %v220 = vsel %vm136, %v218, 0.0
    %v221 = vrot.slane %v220, 4
    %v222 = vadd.f32 %v220, %v221
    %v223 = vrot.slane %v222, 2
    %v224 = vadd.f32 %v222, %v223
    %v225 = vrot.slane %v224, 1
    %v226 = vadd.f32 %v224, %v225
    %v227 = vsel %vm136, %v219, 0.0
    %v228 = vrot.slane %v227, 4
    %v229 = vadd.f32 %v227, %v228
    %v230 = vrot.slane %v229, 2
    %v231 = vadd.f32 %v229, %v230
    %v232 = vrot.slane %v231, 1
    %v233 = vadd.f32 %v231, %v232
    %v234 = vrcp.pop 8.0
    %v235 = vmul.f32 %v226, %v234
    %v236 = vmul.f32 %v233, %v234
    %v237 = vld [vmem:[%s5] sm:$0xff]
    %v238 = vld [vmem:[%s5 + $0x8] sm:$0xff]
    %v239 = vld [vmem:[%s5 + $0x10] sm:$0xff]
    %v240 = vld [vmem:[%s5 + $0x18] sm:$0xff]
    %v241 = vld [vmem:[%s6] sm:$0x1]
    %v243 = vlaneseq
    %v244 = vshrl.u32 %v243, 7
    %v245 = vsub.s32 0, %v244
    %v246 = vrot.slane %v241, %v245
    %vm250 = vcmask 1041409
    %v251 = vsel %vm250, %v236, %v235
    %v252 = vsel %vm136, %v251, 0
    %254 = vmatprep.subr.mxu0 0.0
    %255 = vmatpush1.msra.mxu0 %v237
    %256 = vmatprep.subr.mxu0 0.0
    %257 = vmatpush1.msra.mxu0 %v238
    %258 = vmatprep.subr.mxu0 0.0
    %259 = vmatpush1.msra.mxu0 %v239
    %260 = vmatprep.subr.mxu0 0.0
    %261 = vmatpush1.msra.mxu0 %v240
    %262 = vmatprep.subr.mxu0 0.0
    %263 = vmatpush1.msra.mxu0 0.0
    %264 = vmatprep.subr.mxu0 0.0
    %265 = vmatpush1.msra.mxu0 0.0
    %266 = vmatprep.subr.mxu0 0.0
    %267 = vmatpush1.msra.mxu0 0.0
    %268 = vmatprep.subr.mxu0 0.0
    %269 = vmatpush1.msra.mxu0 0.0
    %270 = vmatprep.subr.mxu0 0.0
    %271 = vmatpush1.msra.mxu0 0.0
    %272 = vmatprep.subr.mxu0 0.0
    %273 = vmatpush1.msra.mxu0 0.0
    %274 = vmatprep.subr.mxu0 0.0
    %275 = vmatpush1.msra.mxu0 0.0
    %276 = vmatprep.subr.mxu0 0.0
    %277 = vmatpush1.msra.mxu0 0.0
    %278 = vmatprep.subr.mxu0 0.0
    %279 = vmatpush1.msra.mxu0 0.0
    %280 = vmatprep.subr.mxu0 0.0
    %281 = vmatpush1.msra.mxu0 0.0
    %282 = vmatprep.subr.mxu0 0.0
    %283 = vmatpush1.msra.mxu0 0.0
    %284 = vmatprep.subr.mxu0 0.0
    %285 = vmatpush1.msra.mxu0 0.0
    %286 = vmatprep.subr.mxu0 0.0
    %287 = vmatpush1.msra.mxu0 0.0
    %288 = vmatprep.subr.mxu0 0.0
    %289 = vmatpush1.msra.mxu0 0.0
    %290 = vmatprep.subr.mxu0 0.0
    %291 = vmatpush1.msra.mxu0 0.0
    %292 = vmatprep.subr.mxu0 0.0
    %293 = vmatpush1.msra.mxu0 0.0
    %294 = vmatprep.subr.mxu0 0.0
    %295 = vmatpush1.msra.mxu0 0.0
    %296 = vmatprep.subr.mxu0 0.0
    %297 = vmatpush1.msra.mxu0 0.0
    %298 = vmatprep.subr.mxu0 0.0
    %299 = vmatpush1.msra.mxu0 0.0
    %300 = vmatprep.subr.mxu0 0.0
    %301 = vmatpush1.msra.mxu0 0.0
    %302 = vmatprep.subr.mxu0 0.0
    %303 = vmatpush1.msra.mxu0 0.0
    %304 = vmatprep.subr.mxu0 0.0
    %305 = vmatpush1.msra.mxu0 0.0
    %306 = vmatprep.subr.mxu0 0.0
    %307 = vmatpush1.msra.mxu0 0.0
    %308 = vmatprep.subr.mxu0 0.0
    %309 = vmatpush1.msra.mxu0 0.0
    %310 = vmatprep.subr.mxu0 0.0
    %311 = vmatpush1.msra.mxu0 0.0
    %312 = vmatprep.subr.mxu0 0.0
    %313 = vmatpush1.msra.mxu0 0.0
    %314 = vmatprep.subr.mxu0 0.0
    %315 = vmatpush1.msra.mxu0 0.0
    %316 = vmatprep.subr.mxu0 0.0
    %317 = vmatpush1.msra.mxu0 0.0
    %318 = vmatprep.mubr.f32.mxu0 0.0
    %319 = vmatmul.mubr.f32.gmra.mrb[0].mxu0 %v252
    %v320 = vpop.f32.mrb[0].mxu0
    %v321 = vadd.f32 %v246, %v320
    %v322 = vpop.f32.mrb[0].mxu0
    %323 = vdwg.mxu0
    %v324 = vmax.f32 %v321, 0.0
    %vm325 = vcmask 123904
    %326 = vst.msk [vmem:[#allocation2] sm:$0x3] %vm325, %v324
    // Predicated region
    $region30: #{tpu_custom_call.1} parent=1 // pred_check
      _
    $region31: #{tpu_custom_call.1} parent=1 // pred_check_branch
      %328 = sbr.rel (0) target = $region33
    $region32: #{tpu_custom_call.1} parent=1 // pred_region
      %s330 = ssub.s32 32, 32
      %331 = vsyncadd [#allocation3], %s330
      %s333 = sshll.u32 [#allocation2], 4
      %s334 = int_to_ptr.vmem [resolvable:$true] %s333
      %336 = dma.vmem_to_hbm [thread:$0]  %s334, 32, %s7, [#allocation3]
    $region33: #{tpu_custom_call.1} parent=1 // pred_fallthru
      _
    // Predicated region
    $region34: #{tpu_custom_call.1} parent=1 // pred_check
      _
    $region35: #{tpu_custom_call.1} parent=1 // pred_check_branch
      %338 = sbr.rel (0) target = $region37
    $region36: #{tpu_custom_call.1} parent=1 // pred_region
      %339 = dma.done [#allocation3], 32
    $region37: #{tpu_custom_call.1} parent=1 // pred_fallthru
      _
    %340 = vsyncpa [#allocation3], 1

</llo_original>
